<compile_context>
chip_gen: v5e
topology: v5e:2x2
jax: 0.10.0
libtpu: 0.0.40
codegen_flags: <defaults>
</compile_context>

<pallas_src>
import math

import jax
import jax.numpy as jnp
from jax.experimental import pallas as pl
from jax.experimental.pallas import tpu as pltpu


# ---------------------------------------------------------------------------
# Fused kernel: one batch element per grid step.
#   x_ref  : (1, C, S//128, 128)  or  (1, C, S)   activations (native dtype)
#   w1t_ref: (C, Cr) f32   linear1.weight.T
#   w2_ref : (C, Cr) f32   linear2.weight (torch layout)
#   o_ref  : same shape/dtype as x_ref
# ---------------------------------------------------------------------------
def _sqex_fused_kernel(x_ref, w1t_ref, w2_ref, o_ref):
    C = x_ref.shape[1]
    inv_s = 1.0 / float(math.prod(x_ref.shape[2:]))

    # Global average pool: f32-accumulated lane reduce (+ sublane reduce for the
    # sublane-dense 4D layout).  No fp32 copy of the full block is materialized.
    red = jnp.sum(x_ref[0], axis=-1, keepdims=True, dtype=jnp.float32)  # (C,[SB,]1)
    if red.ndim == 3:
        red = jnp.sum(red, axis=-2)                                     # (C, 1)
    mean = red * inv_s                                                   # (C, 1)

    # linear1 + ReLU:  h[r] = relu( sum_c mean[c] * W1[r, c] )   (VPU + sublane reduce)
    h = jnp.maximum(
        jnp.sum(mean * w1t_ref[...], axis=0, keepdims=True), 0.0)        # (1, Cr)

    # linear2 + sigmoid:  s[c] = sigmoid( sum_r W2[c, r] * h[r] ) (VPU + lane reduce, EUP)
    s = jax.nn.sigmoid(
        jnp.sum(w2_ref[...] * h, axis=1, keepdims=True))                 # (C, 1)

    # Gate: re-read the native-dtype input block; cast the gate (not the block) so
    # the multiply and the store stay in the input dtype.
    gate = s.astype(o_ref.dtype).reshape((C,) + (1,) * (x_ref.ndim - 2))
    o_ref[0] = x_ref[0] * gate


# ---------------------------------------------------------------------------
# Two-pass fallback, pass 2: elementwise per-channel scale on spatial tiles.
#   x_ref: (1, C, ts), gate_ref: (1, C, 1), o_ref: (1, C, ts)
# ---------------------------------------------------------------------------
def _sqex_scale_kernel(x_ref, gate_ref, o_ref):
    o_ref[...] = x_ref[...] * gate_ref[...]


def _physical_vmem_bytes():
    try:
        info = pltpu.get_tpu_info()
        return int(getattr(info, "vmem_capacity_bytes", 64 << 20))
    except Exception:
        return 64 << 20  # conservative (v7x per-TensorCore VMEM)


def _choose_scale_tile(S, C, itemsize, target_bytes=4 << 20):
    """Lane-dense spatial tile (multiple of 128) targeting ~4 MiB per block."""
    if S <= 128:
        return S
    lanes = max(128, (target_bytes // max(C * itemsize, 1)) // 128 * 128)
    return int(min(lanes, (S // 128) * 128))


def _fused_call(xr, w1t, w2f, out_dtype, vmem_limit_bytes):
    N, C = xr.shape[0], xr.shape[1]
    block = (1,) + xr.shape[1:]
    itemsize = jnp.dtype(xr.dtype).itemsize
    ce = pl.CostEstimate(
        flops=3 * xr.size + 4 * N * w1t.size,
        transcendentals=N * C,
        bytes_accessed=2 * xr.size * itemsize + N * (w1t.size + w2f.size) * 4,
    )
    return pl.pallas_call(
        _sqex_fused_kernel,
        out_shape=jax.ShapeDtypeStruct(xr.shape, out_dtype),
        grid=(N,),
        in_specs=[
            pl.BlockSpec(block, lambda n: (n,) + (0,) * (len(block) - 1)),
            # Constant index_maps: the tiny weight blocks stay resident across steps.
            pl.BlockSpec(w1t.shape, lambda n: (0, 0)),
            pl.BlockSpec(w2f.shape, lambda n: (0, 0)),
        ],
        out_specs=pl.BlockSpec(block, lambda n: (n,) + (0,) * (len(block) - 1)),
        compiler_params=pltpu.CompilerParams(
            dimension_semantics=("parallel",),
            vmem_limit_bytes=int(vmem_limit_bytes),
        ),
        cost_estimate=ce,
    )(xr, w1t, w2f)


def sqex_pallas(x, w1, w2, *, fused_vmem_budget_bytes=None, force_two_pass=False,
                scale_tile=None):
    """x: (N, C, D, H, W); w1: (Cr, C) = linear1.weight; w2: (C, Cr) = linear2.weight."""
    N, C, D, H, W = x.shape
    S = D * H * W
    Cr = w1.shape[0]
    itemsize = jnp.dtype(x.dtype).itemsize

    if fused_vmem_budget_bytes is None:
        fused_vmem_budget_bytes = (_physical_vmem_bytes() * 3) // 4

    # Double-buffered input + output blocks + weights + slack.
    block_bytes = C * S * itemsize
    fused_need = 4 * block_bytes + 2 * C * Cr * 4 + (2 << 20)

    w1t = w1.astype(jnp.float32).T       # (C, Cr) - transpose once at param prep
    w2f = w2.astype(jnp.float32)         # (C, Cr) - torch layout, used as-is

    if (not force_two_pass) and fused_need <= fused_vmem_budget_bytes:
        # ---------------- fused single-pass path ----------------
        if S % 128 == 0:
            # Spatial on sublanes *and* lanes: dense vregs regardless of C.
            xr = x.reshape(N, C, S // 128, 128)
        else:
            # TODO(synk): pad S to a multiple of 128 in the wrapper to keep stores
            # lane-dense (tail columns are masked vst.msk otherwise).
            xr = x.reshape(N, C, S)
        vmem_limit = min(max(fused_need, 32 << 20), fused_vmem_budget_bytes)
        out = _fused_call(xr, w1t, w2f, x.dtype, vmem_limit)
        return out.reshape(N, C, D, H, W)

    # ---------------- two-pass fallback (large volumes / v7x 64 MiB VMEM) ----------
    # Pass 1: gates.  The global reduce + two tiny matmuls are trivial for XLA;
    # total extra HBM traffic vs the fused path is one more read of x (1.5x).
    mean = jnp.mean(x, axis=(2, 3, 4), dtype=jnp.float32)          # (N, C)
    h = jnp.maximum(mean @ w1t, 0.0)                                # (N, Cr)
    gate = jax.nn.sigmoid(h @ w2f.T).astype(x.dtype)                # (N, C)

    # Pass 2: spatially tiled, fully parallel elementwise scale.
    xr = x.reshape(N, C, S)
    ts = int(scale_tile) if scale_tile is not None else _choose_scale_tile(S, C, itemsize)
    grid = (N, pl.cdiv(S, ts))
    scale_need = 4 * C * ts * itemsize + 4 * C * itemsize + (1 << 20)
    vmem_limit = min(max(scale_need, 32 << 20), fused_vmem_budget_bytes)
    ce = pl.CostEstimate(
        flops=N * C * S,
        transcendentals=0,
        bytes_accessed=2 * N * C * S * itemsize + N * C * itemsize,
    )
    out = pl.pallas_call(
        _sqex_scale_kernel,
        out_shape=jax.ShapeDtypeStruct((N, C, S), x.dtype),
        grid=grid,
        in_specs=[
            pl.BlockSpec((1, C, ts), lambda n, t: (n, 0, t)),
            pl.BlockSpec((1, C, 1), lambda n, t: (n, 0, 0)),
        ],
        out_specs=pl.BlockSpec((1, C, ts), lambda n, t: (n, 0, t)),
        compiler_params=pltpu.CompilerParams(
            dimension_semantics=("parallel", "parallel"),
            vmem_limit_bytes=int(vmem_limit),
        ),
        cost_estimate=ce,
    )(xr, gate[:, :, None])
    return out.reshape(N, C, D, H, W)


# ---------------------------------------------------------------------------
# Pure-JAX reference (mirrors the PyTorch module) for a correctness check.
# ---------------------------------------------------------------------------
def sqex_ref(x, w1, w2):
    y = jnp.mean(x, axis=(2, 3, 4))                          # (N, C)
    h = jnp.maximum(y @ w1.T, 0.0)                           # (N, Cr)
    s = jax.nn.sigmoid(h @ w2.T)                             # (N, C)
    return x * s[:, :, None, None, None]


def init_params(key, n_features, reduction=6):
    assert n_features % reduction == 0
    cr = n_features // reduction
    k1, k2 = jax.random.split(key)
    # torch nn.Linear weight layouts, no bias.
    w1 = jax.random.normal(k1, (cr, n_features), jnp.float32) * (1.0 / jnp.sqrt(n_features))
    w2 = jax.random.normal(k2, (n_features, cr), jnp.float32) * (1.0 / jnp.sqrt(cr))
    return {"w1": w1, "w2": w2}


if __name__ == "__main__":
    key = jax.random.PRNGKey(0)
    kx, kp, kx2 = jax.random.split(key, 3)

    # Small shapes consistent with the module: C divisible by reduction=6,
    # S = D*H*W = 256 (multiple of 128 -> sublane/lane-dense fused blocks).
    N, C, D, H, W = 2, 12, 8, 8, 4
    x = jax.random.normal(kx, (N, C, D, H, W), jnp.float32)
    params = init_params(kp, C, reduction=6)

    # Fused single-pass path.
    fwd = jax.jit(lambda p, xx: sqex_pallas(xx, p["w1"], p["w2"]))
    out = jax.block_until_ready(fwd(params, x))
    ref = sqex_ref(x, params["w1"], params["w2"])
    assert out.shape == (N, C, D, H, W), out.shape
    assert bool(jnp.all(jnp.isfinite(out)))
    assert jnp.allclose(out, ref, rtol=1e-5, atol=1e-5), float(jnp.max(jnp.abs(out - ref)))

    # Two-pass fallback path (forced), including a ragged spatial tail:
    # S = 8*8*10 = 640 with tile 256 -> 3 tiles, last one partially padded.
    D2, H2, W2 = 8, 8, 10
    x2 = jax.random.normal(kx2, (N, C, D2, H2, W2), jnp.float32)
    fwd2 = jax.jit(lambda p, xx: sqex_pallas(xx, p["w1"], p["w2"],
                                             force_two_pass=True, scale_tile=256))
    out2 = jax.block_until_ready(fwd2(params, x2))
    ref2 = sqex_ref(x2, params["w1"], params["w2"])
    assert out2.shape == (N, C, D2, H2, W2), out2.shape
    assert bool(jnp.all(jnp.isfinite(out2)))
    assert jnp.allclose(out2, ref2, rtol=1e-5, atol=1e-5), float(jnp.max(jnp.abs(out2 - ref2)))

    print("KERNEL_OK")
</pallas_src>

<mosaic_0001>
module attributes {stable_mosaic.version = 11 : i64} {
  func.func @_sqex_fused_kernel(%arg0: i32, %arg1: memref<1x12x2x128xf32, #tpu.memory_space<vmem>>, %arg2: memref<12x2xf32, #tpu.memory_space<vmem>>, %arg3: memref<12x2xf32, #tpu.memory_space<vmem>>, %arg4: memref<1x12x2x128xf32, #tpu.memory_space<vmem>>) attributes {dimension_semantics = [#tpu.dimension_semantics<parallel>], iteration_bounds = array<i64: 2>, scalar_prefetch = 0 : i64, scratch_operands = 0 : i64, tpu.core_type = #tpu.core_type<tc>, window_params = [{transform_indices = @transform_0, window_bounds = array<i64: 1, 12, 2, 128>}, {pipeline_mode = #tpu.pipeline_mode<synchronous>, transform_indices = @transform_1, window_bounds = array<i64: 12, 2>}, {pipeline_mode = #tpu.pipeline_mode<synchronous>, transform_indices = @transform_2, window_bounds = array<i64: 12, 2>}, {transform_indices = @transform_3, window_bounds = array<i64: 1, 12, 2, 128>}]} {
    %c0 = arith.constant 0 : index
    %c0_0 = arith.constant 0 : index
    %c0_1 = arith.constant 0 : index
    %c0_2 = arith.constant 0 : index
    %0 = vector.load %arg1[%c0, %c0_0, %c0_1, %c0_2] : memref<1x12x2x128xf32, #tpu.memory_space<vmem>>, vector<1x12x2x128xf32>
    %1 = vector.shape_cast %0 : vector<1x12x2x128xf32> to vector<12x2x128xf32>
    %cst = arith.constant dense<0.000000e+00> : vector<12x2xf32>
    %2 = vector.multi_reduction <add>, %1, %cst [2] : vector<12x2x128xf32> to vector<12x2xf32>
    %3 = vector.shape_cast %2 : vector<12x2xf32> to vector<12x2x1xf32>
    %cst_3 = arith.constant dense<0.000000e+00> : vector<12x1xf32>
    %4 = vector.multi_reduction <add>, %3, %cst_3 [1] : vector<12x2x1xf32> to vector<12x1xf32>
    %cst_4 = arith.constant 3.906250e-03 : f32
    %5 = vector.broadcast %cst_4 : f32 to vector<12x1xf32>
    %6 = arith.mulf %4, %5 : vector<12x1xf32>
    %c0_5 = arith.constant 0 : index
    %c0_6 = arith.constant 0 : index
    %7 = vector.load %arg2[%c0_5, %c0_6] : memref<12x2xf32, #tpu.memory_space<vmem>>, vector<12x2xf32>
    %8 = vector.broadcast %6 : vector<12x1xf32> to vector<12x2xf32>
    %9 = arith.mulf %8, %7 : vector<12x2xf32>
    %cst_7 = arith.constant dense<0.000000e+00> : vector<2xf32>
    %10 = vector.multi_reduction <add>, %9, %cst_7 [0] : vector<12x2xf32> to vector<2xf32>
    %11 = vector.shape_cast %10 : vector<2xf32> to vector<1x2xf32>
    %cst_8 = arith.constant 0.000000e+00 : f32
    %12 = vector.broadcast %cst_8 : f32 to vector<1x2xf32>
    %13 = arith.maximumf %11, %12 : vector<1x2xf32>
    %c0_9 = arith.constant 0 : index
    %c0_10 = arith.constant 0 : index
    %14 = vector.load %arg3[%c0_9, %c0_10] : memref<12x2xf32, #tpu.memory_space<vmem>>, vector<12x2xf32>
    %15 = vector.broadcast %13 : vector<1x2xf32> to vector<12x2xf32>
    %16 = arith.mulf %14, %15 : vector<12x2xf32>
    %cst_11 = arith.constant dense<0.000000e+00> : vector<12xf32>
    %17 = vector.multi_reduction <add>, %16, %cst_11 [1] : vector<12x2xf32> to vector<12xf32>
    %18 = vector.shape_cast %17 : vector<12xf32> to vector<12x1xf32>
    %19 = arith.negf %18 : vector<12x1xf32>
    %20 = math.exp %19 : vector<12x1xf32>
    %cst_12 = arith.constant 1.000000e+00 : f32
    %21 = vector.broadcast %cst_12 : f32 to vector<12x1xf32>
    %22 = arith.addf %21, %20 : vector<12x1xf32>
    %23 = arith.divf %21, %22 : vector<12x1xf32>
    %24 = vector.shape_cast %23 : vector<12x1xf32> to vector<12x1x1xf32>
    %c0_13 = arith.constant 0 : index
    %c0_14 = arith.constant 0 : index
    %c0_15 = arith.constant 0 : index
    %c0_16 = arith.constant 0 : index
    %25 = vector.load %arg1[%c0_13, %c0_14, %c0_15, %c0_16] : memref<1x12x2x128xf32, #tpu.memory_space<vmem>>, vector<1x12x2x128xf32>
    %26 = vector.shape_cast %25 : vector<1x12x2x128xf32> to vector<12x2x128xf32>
    %27 = vector.broadcast %24 : vector<12x1x1xf32> to vector<12x2x128xf32>
    %28 = arith.mulf %26, %27 : vector<12x2x128xf32>
    %c0_17 = arith.constant 0 : index
    %c0_18 = arith.constant 0 : index
    %c0_19 = arith.constant 0 : index
    %c0_20 = arith.constant 0 : index
    %29 = vector.load %arg4[%c0_17, %c0_18, %c0_19, %c0_20] : memref<1x12x2x128xf32, #tpu.memory_space<vmem>>, vector<1x12x2x128xf32>
    %30 = vector.shape_cast %29 : vector<1x12x2x128xf32> to vector<12x2x128xf32>
    %31 = vector.shape_cast %28 : vector<12x2x128xf32> to vector<1x12x2x128xf32>
    tpu.vector_store %arg4[%c0_17, %c0_18, %c0_19, %c0_20], %31 {strides = array<i32>} : memref<1x12x2x128xf32, #tpu.memory_space<vmem>>, vector<1x12x2x128xf32>,
    return
  }
  func.func @transform_0(%arg0: i32) -> (i32, i32, i32, i32) {
    %c0_i32 = arith.constant 0 : i32
    %c0_i32_0 = arith.constant 0 : i32
    %c0_i32_1 = arith.constant 0 : i32
    %c0_i32_2 = arith.constant 0 : i32
    return %arg0, %c0_i32, %c0_i32_0, %c0_i32_1 : i32, i32, i32, i32
  }
  func.func @transform_1(%arg0: i32) -> (i32, i32) {
    %c0_i32 = arith.constant 0 : i32
    %c0_i32_0 = arith.constant 0 : i32
    %c0_i32_1 = arith.constant 0 : i32
    return %c0_i32, %c0_i32_0 : i32, i32
  }
  func.func @transform_2(%arg0: i32) -> (i32, i32) {
    %c0_i32 = arith.constant 0 : i32
    %c0_i32_0 = arith.constant 0 : i32
    %c0_i32_1 = arith.constant 0 : i32
    return %c0_i32, %c0_i32_0 : i32, i32
  }
  func.func @transform_3(%arg0: i32) -> (i32, i32, i32, i32) {
    %c0_i32 = arith.constant 0 : i32
    %c0_i32_0 = arith.constant 0 : i32
    %c0_i32_1 = arith.constant 0 : i32
    %c0_i32_2 = arith.constant 0 : i32
    return %arg0, %c0_i32, %c0_i32_0, %c0_i32_1 : i32, i32, i32, i32
  }
}

</mosaic_0001>

<llo_original>
// kernel: _lambda_.1
$region0: #{_lambda_.1}
  #allocation0 [shape = 'u32[]', space=smem, size = 0x4, offset = 0x4, fixed_abs, tag = 'smem constant byte address 0x4 - core index']
  #allocation1 [shape = 'u32[72,128]{1,0:T(1,128)}', space=vmem, size = 0x9000, scoped, tag = 'internal scratch']
  %s0 = inlined_call_operand.vmem [shape: f32[2,12,2,128], index: 0, kind: input, shape index: {}]
  %s1 = inlined_call_operand.vmem [shape: f32[12,2], index: 1, kind: input, shape index: {}]
  %s2 = inlined_call_operand.vmem [shape: f32[12,2], index: 2, kind: input, shape index: {}]
  %s3 = inlined_call_operand.vmem [shape: f32[2,12,2,128], index: 3, kind: output, shape index: {}]
  %s4 = sld [smem:[#allocation0]]
  $region45: #{_lambda_.1} parent=0
    _
  %s6 = ssub.s32 1, %s4
  %s7 = scalar_select 0, %s6, %s4
  loop: start=0, step=1, limit=4
  $region2: #{_lambda_.1} parent=0 // loop_pre_header
    _
  $region3: #{_lambda_.1} parent=0 // loop_header
    %s9 = sphi 0, %s13
    %p10 = scmp.ge.s32.totalorder %s9, 4
    %s19 = sphi 0, %s21
    %s22 = sphi 0, %s19
    %s23 = sphi 0, %s22
    %s39 = sphi 0, %s23
    %s43 = sphi 0, %s43
    %s45 = sphi 0, %s43
    %s46 = sphi 0, %s45
    %s60 = sphi 0, %s46
    %s64 = sphi 0, %s64
    %s66 = sphi 0, %s64
    %s67 = sphi 0, %s66
    %s81 = sphi 0, %s67
    %s87 = sphi 0, %s89
    %s90 = sphi 0, %s87
    %s91 = sphi 0, %s90
    %s107 = sphi 0, %s91
  $region4: #{_lambda_.1} parent=0 // loop_header_branch
    %12 = sbr.rel (%p10) target = $region8
  $region5: #{_lambda_.1} parent=0 // loop_body
    %s14 = ssub.s32 %s9, 1
    %s15 = ssub.s32 %s9, 2
    %s16 = sadd.s32 %s9, 1
    %s17 = ssub.s32 %s9, %s16
    %p18 = scmp.eq.s32.totalorder %s17, 0
    %s20 = sadd.s32 %s19, 1
    %s21 = scalar_select %p18, %s19, %s20
    %p24 = pneg %p18
    %p25 = scmp.eq.s32.totalorder %s9, 1
    %p26 = por %p24, %p25
    %p27 = scmp.ne.s32.totalorder %s19, %s22
    %p28 = scmp.eq.s32.totalorder %s9, 0
    %p29 = por %p27, %p28
    %p30 = scmp.ne.s32.totalorder %s19, %s22
    %p31 = scmp.eq.s32.totalorder %s14, 1
    %p32 = por %p30, %p31
    %p33 = scmp.ne.s32.totalorder %s22, %s23
    %p34 = scmp.eq.s32.totalorder %s14, 0
    %p35 = por %p33, %p34
    %p36 = scmp.ne.s32.totalorder %s22, %s23
    %p37 = scmp.eq.s32.totalorder %s15, 1
    %p38 = por %p36, %p37
    %p40 = scmp.ne.s32.totalorder %s23, %s39
    %p41 = scmp.eq.s32.totalorder %s15, 0
    %p42 = por %p40, %p41
    %s44 = sadd.s32 %s43, 1
    %p47 = scmp.eq.s32.totalorder %s9, 1
    %p48 = scmp.ne.s32.totalorder %s43, %s45
    %p49 = scmp.eq.s32.totalorder %s9, 0
    %p50 = por %p48, %p49
    %p51 = scmp.ne.s32.totalorder %s43, %s45
    %p52 = scmp.eq.s32.totalorder %s14, 1
    %p53 = por %p51, %p52
    %p54 = scmp.ne.s32.totalorder %s45, %s46
    %p55 = scmp.eq.s32.totalorder %s14, 0
    %p56 = por %p54, %p55
    %p57 = scmp.ne.s32.totalorder %s45, %s46
    %p58 = scmp.eq.s32.totalorder %s15, 1
    %p59 = por %p57, %p58
    %p61 = scmp.ne.s32.totalorder %s46, %s60
    %p62 = scmp.eq.s32.totalorder %s15, 0
    %p63 = por %p61, %p62
    %s65 = sadd.s32 %s64, 1
    %p68 = scmp.eq.s32.totalorder %s9, 1
    %p69 = scmp.ne.s32.totalorder %s64, %s66
    %p70 = scmp.eq.s32.totalorder %s9, 0
    %p71 = por %p69, %p70
    %p72 = scmp.ne.s32.totalorder %s64, %s66
    %p73 = scmp.eq.s32.totalorder %s14, 1
    %p74 = por %p72, %p73
    %p75 = scmp.ne.s32.totalorder %s66, %s67
    %p76 = scmp.eq.s32.totalorder %s14, 0
    %p77 = por %p75, %p76
    %p78 = scmp.ne.s32.totalorder %s66, %s67
    %p79 = scmp.eq.s32.totalorder %s15, 1
    %p80 = por %p78, %p79
    %p82 = scmp.ne.s32.totalorder %s67, %s81
    %p83 = scmp.eq.s32.totalorder %s15, 0
    %p84 = por %p82, %p83
    %s85 = ssub.s32 %s9, %s16
    %p86 = scmp.eq.s32.totalorder %s85, 0
    %s88 = sadd.s32 %s87, 1
    %s89 = scalar_select %p86, %s87, %s88
    %p92 = pneg %p86
    %p93 = scmp.eq.s32.totalorder %s9, 1
    %p94 = por %p92, %p93
    %p95 = scmp.ne.s32.totalorder %s87, %s90
    %p96 = scmp.eq.s32.totalorder %s9, 0
    %p97 = por %p95, %p96
    %p98 = scmp.ne.s32.totalorder %s87, %s90
    %p99 = scmp.eq.s32.totalorder %s14, 1
    %p100 = por %p98, %p99
    %p101 = scmp.ne.s32.totalorder %s90, %s91
    %p102 = scmp.eq.s32.totalorder %s14, 0
    %p103 = por %p101, %p102
    %p104 = scmp.ne.s32.totalorder %s90, %s91
    %p105 = scmp.eq.s32.totalorder %s15, 1
    %p106 = por %p104, %p105
    %p108 = scmp.ne.s32.totalorder %s91, %s107
    %p109 = scmp.eq.s32.totalorder %s15, 0
    %p110 = por %p108, %p109
    %p111 = scmp.le.s32.totalorder 1, %s9
    %p112 = scmp.lt.s32.totalorder %s9, 3
    %p113 = pnand %p111, %p112
    %p114 = pneg %p113
    // Predicated region
    $region9: #{_lambda_.1} parent=5 // pred_check
      _
    $region10: #{_lambda_.1} parent=5 // pred_check_branch
      %116 = sbr.rel (%p113) target = $region12
    $region11: #{_lambda_.1} parent=5 // pred_region
      %s117 = ssub.s32 %s9, 1
      // Predicated region
      $region13: #{_lambda_.1} parent=11 // pred_check
        %p118 = pneg %p56
      $region14: #{_lambda_.1} parent=11 // pred_check_branch
        %120 = sbr.rel (%p118) target = $region16
      $region15: #{_lambda_.1} parent=11 // pred_region
        _
      $region16: #{_lambda_.1} parent=11 // pred_fallthru
        _
      // Predicated region
      $region17: #{_lambda_.1} parent=11 // pred_check
        %p121 = pneg %p77
      $region18: #{_lambda_.1} parent=11 // pred_check_branch
        %123 = sbr.rel (%p121) target = $region20
      $region19: #{_lambda_.1} parent=11 // pred_region
        _
      $region20: #{_lambda_.1} parent=11 // pred_fallthru
        _
    $region12: #{_lambda_.1} parent=5 // pred_fallthru
      _
    %p124 = scmp.lt.s32.totalorder %s9, 2
    // Predicated region
    $region21: #{_lambda_.1} parent=5 // pred_check
      %p125 = pneg %p124
    $region22: #{_lambda_.1} parent=5 // pred_check_branch
      %127 = sbr.rel (%p125) target = $region24
    $region23: #{_lambda_.1} parent=5 // pred_region
      // Predicated region
      $region25: #{_lambda_.1} parent=23 // pred_check
        %p128 = pneg %p29
      $region26: #{_lambda_.1} parent=23 // pred_check_branch
        %130 = sbr.rel (%p128) target = $region28
      $region27: #{_lambda_.1} parent=23 // pred_region
        %p131 = scmp.lt.s32.totalorder %s9, 1
        %s132 = scalar_select %p131, %s9, 1
        %s133 = smul.addr %s132, 12
        %s134 = smul.addr %s133, 2
        %s135 = scalar_lea.vmem %s0, %s134
      $region28: #{_lambda_.1} parent=23 // pred_fallthru
        _
    $region24: #{_lambda_.1} parent=5 // pred_fallthru
      _
    %p136 = scmp.le.s32.totalorder 1, %s9
    %p137 = scmp.lt.s32.totalorder %s9, 3
    %p138 = pnand %p136, %p137
    %p139 = pneg %p138
    // Predicated region
    $region29: #{_lambda_.1} parent=5 // pred_check
      _
    $region30: #{_lambda_.1} parent=5 // pred_check_branch
      %141 = sbr.rel (%p138) target = $region32
    $region31: #{_lambda_.1} parent=5 // pred_region
      %s142 = ssub.s32 %s9, 1
      %p143 = scmp.lt.s32.totalorder %s14, 1
      %s144 = scalar_select %p143, %s14, 1
      %s145 = smul.addr %s144, 12
      %s146 = smul.addr %s145, 2
      %s147 = scalar_lea.vmem %s0, %s146
      %p148 = pneg %p35
      %p149 = pneg %p32
      %p150 = pneg %p56
      %p151 = pneg %p53
      %p152 = pneg %p77
      %p153 = pneg %p74
      %p154 = pneg %p103
      %p155 = pneg %p100
      %p156 = scmp.lt.s32.totalorder %s14, 1
      %s157 = scalar_select %p156, %s14, 1
      %s158 = smul.addr %s157, 12
      %s159 = smul.addr %s158, 2
      %s160 = scalar_lea.vmem %s3, %s159
      %p161 = scmp.lt.s32.totalorder %s14, 1
      %s162 = scalar_select %p161, %s14, 1
      %s163 = smul.addr %s162, 12
      %s164 = smul.addr %s163, 2
      %s165 = scalar_lea.vmem %s0, %s164
      %p166 = scmp.lt.s32.totalorder %s14, 1
      %s167 = scalar_select %p166, %s14, 1
      %s168 = smul.addr %s167, 12
      %s169 = smul.addr %s168, 2
      %s170 = scalar_lea.vmem %s3, %s169
      %v171 = vld [vmem:[%s165] sm:$0x3]
      %v172 = vld [vmem:[%s165 + $0x2] sm:$0x3]
      %v173 = vld [vmem:[%s165 + $0x4] sm:$0x3]
      %v174 = vld [vmem:[%s165 + $0x6] sm:$0x3]
      %v175 = vld [vmem:[%s165 + $0x8] sm:$0x3]
      %v176 = vld [vmem:[%s165 + $0xa] sm:$0x3]
      %v177 = vld [vmem:[%s165 + $0xc] sm:$0x3]
      %v178 = vld [vmem:[%s165 + $0xe] sm:$0x3]
      %v179 = vld [vmem:[%s165 + $0x10] sm:$0x3]
      %v180 = vld [vmem:[%s165 + $0x12] sm:$0x3]
      %v181 = vld [vmem:[%s165 + $0x14] sm:$0x3]
      %v182 = vld [vmem:[%s165 + $0x16] sm:$0x3]
      %vm183 = vcmask 1041408
      %v184 = vsel %vm183, %v171, 0.0
      %185 = vadd.xlane.f32.xlu0 %v184
      %v186 = vpop.xlane.xlu0 %185
      %v187 = vsel %vm183, %v172, 0.0
      %188 = vadd.xlane.f32.xlu0 %v187
      %v189 = vpop.xlane.xlu0 %188
      %v190 = vsel %vm183, %v173, 0.0
      %191 = vadd.xlane.f32.xlu0 %v190
      %v192 = vpop.xlane.xlu0 %191
      %v193 = vsel %vm183, %v174, 0.0
      %194 = vadd.xlane.f32.xlu0 %v193
      %v195 = vpop.xlane.xlu0 %194
      %v196 = vsel %vm183, %v175, 0.0
      %197 = vadd.xlane.f32.xlu0 %v196
      %v198 = vpop.xlane.xlu0 %197
      %v199 = vsel %vm183, %v176, 0.0
      %200 = vadd.xlane.f32.xlu0 %v199
      %v201 = vpop.xlane.xlu0 %200
      %v202 = vsel %vm183, %v177, 0.0
      %203 = vadd.xlane.f32.xlu0 %v202
      %v204 = vpop.xlane.xlu0 %203
      %v205 = vsel %vm183, %v178, 0.0
      %206 = vadd.xlane.f32.xlu0 %v205
      %v207 = vpop.xlane.xlu0 %206
      %v208 = vsel %vm183, %v179, 0.0
      %209 = vadd.xlane.f32.xlu0 %v208
      %v210 = vpop.xlane.xlu0 %209
      %v211 = vsel %vm183, %v180, 0.0
      %212 = vadd.xlane.f32.xlu0 %v211
      %v213 = vpop.xlane.xlu0 %212
      %v214 = vsel %vm183, %v181, 0.0
      %215 = vadd.xlane.f32.xlu0 %v214
      %v216 = vpop.xlane.xlu0 %215
      %v217 = vsel %vm183, %v182, 0.0
      %218 = vadd.xlane.f32.xlu0 %v217
      %v219 = vpop.xlane.xlu0 %218
      %v220 = vsel %vm183, %v186, 0.0
      %v221 = vrot.slane %v220, 4
      %v222 = vadd.f32 %v220, %v221
      %v223 = vrot.slane %v222, 2
      %v224 = vadd.f32 %v222, %v223
      %v225 = vrot.slane %v224, 1
      %v226 = vadd.f32 %v224, %v225
      %v227 = vsel %vm183, %v189, 0.0
      %v228 = vrot.slane %v227, 4
      %v229 = vadd.f32 %v227, %v228
      %v230 = vrot.slane %v229, 2
      %v231 = vadd.f32 %v229, %v230
      %v232 = vrot.slane %v231, 1
      %v233 = vadd.f32 %v231, %v232
      %v234 = vsel %vm183, %v192, 0.0
      %v235 = vrot.slane %v234, 4
      %v236 = vadd.f32 %v234, %v235
      %v237 = vrot.slane %v236, 2
      %v238 = vadd.f32 %v236, %v237
      %v239 = vrot.slane %v238, 1
      %v240 = vadd.f32 %v238, %v239
      %v241 = vsel %vm183, %v195, 0.0
      %v242 = vrot.slane %v241, 4
      %v243 = vadd.f32 %v241, %v242
      %v244 = vrot.slane %v243, 2
      %v245 = vadd.f32 %v243, %v244
      %v246 = vrot.slane %v245, 1
      %v247 = vadd.f32 %v245, %v246
      %v248 = vsel %vm183, %v198, 0.0
      %v249 = vrot.slane %v248, 4
      %v250 = vadd.f32 %v248, %v249
      %v251 = vrot.slane %v250, 2
      %v252 = vadd.f32 %v250, %v251
      %v253 = vrot.slane %v252, 1
      %v254 = vadd.f32 %v252, %v253
      %v255 = vsel %vm183, %v201, 0.0
      %v256 = vrot.slane %v255, 4
      %v257 = vadd.f32 %v255, %v256
      %v258 = vrot.slane %v257, 2
      %v259 = vadd.f32 %v257, %v258
      %v260 = vrot.slane %v259, 1
      %v261 = vadd.f32 %v259, %v260
      %v262 = vsel %vm183, %v204, 0.0
      %v263 = vrot.slane %v262, 4
      %v264 = vadd.f32 %v262, %v263
      %v265 = vrot.slane %v264, 2
      %v266 = vadd.f32 %v264, %v265
      %v267 = vrot.slane %v266, 1
      %v268 = vadd.f32 %v266, %v267
      %v269 = vsel %vm183, %v207, 0.0
      %v270 = vrot.slane %v269, 4
      %v271 = vadd.f32 %v269, %v270
      %v272 = vrot.slane %v271, 2
      %v273 = vadd.f32 %v271, %v272
      %v274 = vrot.slane %v273, 1
      %v275 = vadd.f32 %v273, %v274
      %v276 = vsel %vm183, %v210, 0.0
      %v277 = vrot.slane %v276, 4
      %v278 = vadd.f32 %v276, %v277
      %v279 = vrot.slane %v278, 2
      %v280 = vadd.f32 %v278, %v279
      %v281 = vrot.slane %v280, 1
      %v282 = vadd.f32 %v280, %v281
      %v283 = vsel %vm183, %v213, 0.0
      %v284 = vrot.slane %v283, 4
      %v285 = vadd.f32 %v283, %v284
      %v286 = vrot.slane %v285, 2
      %v287 = vadd.f32 %v285, %v286
      %v288 = vrot.slane %v287, 1
      %v289 = vadd.f32 %v287, %v288
      %v290 = vsel %vm183, %v216, 0.0
      %v291 = vrot.slane %v290, 4
      %v292 = vadd.f32 %v290, %v291
      %v293 = vrot.slane %v292, 2
      %v294 = vadd.f32 %v292, %v293
      %v295 = vrot.slane %v294, 1
      %v296 = vadd.f32 %v294, %v295
      %v297 = vsel %vm183, %v219, 0.0
      %v298 = vrot.slane %v297, 4
      %v299 = vadd.f32 %v297, %v298
      %v300 = vrot.slane %v299, 2
      %v301 = vadd.f32 %v299, %v300
      %v302 = vrot.slane %v301, 1
      %v303 = vadd.f32 %v301, %v302
      %v304 = vmul.f32 %v226, 0.00390625
      %v305 = vmul.f32 %v233, 0.00390625
      %v306 = vmul.f32 %v240, 0.00390625
      %v307 = vmul.f32 %v247, 0.00390625
      %v308 = vmul.f32 %v254, 0.00390625
      %v309 = vmul.f32 %v261, 0.00390625
      %v310 = vmul.f32 %v268, 0.00390625
      %v311 = vmul.f32 %v275, 0.00390625
      %v312 = vmul.f32 %v282, 0.00390625
      %v313 = vmul.f32 %v289, 0.00390625
      %v314 = vmul.f32 %v296, 0.00390625
      %v315 = vmul.f32 %v303, 0.00390625
      %v316 = vld [vmem:[%s1] sm:$0xff]
      %v317 = vld [vmem:[%s1 + $0x8] sm:$0xf]
      %v320 = vrot.slane %v316, 1
      %v321 = vrot.slane %v316, 2
      %v322 = vrot.slane %v316, 3
      %v323 = vrot.slane %v316, 4
      %v324 = vrot.slane %v316, 5
      %v325 = vrot.slane %v316, 6
      %v326 = vrot.slane %v316, 7
      %v327 = vrot.slane %v317, 1
      %v328 = vrot.slane %v317, 2
      %v329 = vrot.slane %v317, 3
      %v342 = vmul.f32 %v304, %v316
      %v343 = vmul.f32 %v305, %v320
      %v344 = vmul.f32 %v306, %v321
      %v345 = vmul.f32 %v307, %v322
      %v346 = vmul.f32 %v308, %v323
      %v347 = vmul.f32 %v309, %v324
      %v348 = vmul.f32 %v310, %v325
      %v349 = vmul.f32 %v311, %v326
      %v350 = vmul.f32 %v312, %v317
      %v351 = vmul.f32 %v313, %v327
      %v352 = vmul.f32 %v314, %v328
      %v353 = vmul.f32 %v315, %v329
      %v366 = vrot.slane %v343, 7
      %vm367 = vcmask 1041409
      %v368 = vsel %vm367, %v366, %v342
      %v369 = vrot.slane %v344, 6
      %vm370 = vcmask 1042434
      %v371 = vsel %vm370, %v369, %v368
      %v372 = vrot.slane %v345, 5
      %vm373 = vcmask 1043459
      %v374 = vsel %vm373, %v372, %v371
      %v375 = vrot.slane %v346, 4
      %vm376 = vcmask 1044484
      %v377 = vsel %vm376, %v375, %v374
      %v378 = vrot.slane %v347, 3
      %vm379 = vcmask 1045509
      %v380 = vsel %vm379, %v378, %v377
      %v381 = vrot.slane %v348, 2
      %vm382 = vcmask 1046534
      %v383 = vsel %vm382, %v381, %v380
      %v384 = vrot.slane %v349, 1
      %vm385 = vcmask 1047559
      %v386 = vsel %vm385, %v384, %v383
      %v387 = vrot.slane %v351, 7
      %v388 = vsel %vm367, %v387, %v350
      %v389 = vrot.slane %v352, 6
      %v390 = vsel %vm370, %v389, %v388
      %v391 = vrot.slane %v353, 5
      %v392 = vsel %vm373, %v391, %v390
      %vm395 = vcmask 15360
      %v396 = vsel %vm395, %v386, 0.0
      %vm397 = vcmask 11264
      %v398 = vsel %vm397, %v392, 0.0
      %v399 = vadd.f32 %v396, %v398
      %v400 = vrot.slane %v399, 4
      %v401 = vadd.f32 %v399, %v400
      %v402 = vrot.slane %v401, 2
      %v403 = vadd.f32 %v401, %v402
      %v404 = vrot.slane %v403, 1
      %v405 = vadd.f32 %v403, %v404
      %v406 = vmax.f32 %v405, 0.0
      %v407 = vld [vmem:[%s2] sm:$0xff]
      %v408 = vld [vmem:[%s2 + $0x8] sm:$0xf]
      %v409 = vperm.slane %v406, 0
      %v410 = vmul.f32 %v407, %v409
      %v411 = vmul.f32 %v408, %v409
      %v412 = vsel %vm395, %v410, 0.0
      %413 = vadd.xlane.f32.xlu0 %v412
      %v414 = vpop.xlane.xlu0 %413
      %v415 = vsel %vm397, %v411, 0.0
      %416 = vadd.xlane.f32.xlu0 %v415
      %v417 = vpop.xlane.xlu0 %416
      %v418 = vxor.u32 %v414, 2147483648
      %v419 = vxor.u32 %v417, 2147483648
      %v420 = vmul.f32 %v418, 1.442695
      %v421 = vpow.pop %v420
      %v422 = vmul.f32 %v419, 1.442695
      %v423 = vpow.pop %v422
      %v424 = vadd.f32 %v421, 1.0
      %v425 = vadd.f32 %v423, 1.0
      %v426 = vrcp.pop %v424
      %v427 = vmul.f32 %v424, %v426
      %v428 = vsub.f32 1.0, %v427
      %v429 = vmul.f32 %v426, %v428
      %v430 = vadd.f32 %v426, %v429
      %vm431 = vweird.f32 %v424
      %vm432 = vweird.f32 %v426
      %vm433 = vmor %vm431, %vm432
      %v434 = vsel %vm433, %v426, %v430
      %v435 = vand.u32 2147483647, %v424
      %vm436 = vcmp.eq.f32.partialorder %v435, 8.507059e+37
      %v437 = vand.u32 %v424, 2147483648
      %v438 = vor.u32 1.1754944e-38, %v437
      %v439 = vsel %vm436, %v438, %v434
      %v440 = vmul.f32 1.0, %v439
      %v441 = vrcp.pop %v425
      %v442 = vmul.f32 %v425, %v441
      %v443 = vsub.f32 1.0, %v442
      %v444 = vmul.f32 %v441, %v443
      %v445 = vadd.f32 %v441, %v444
      %vm446 = vweird.f32 %v425
      %vm447 = vweird.f32 %v441
      %vm448 = vmor %vm446, %vm447
      %v449 = vsel %vm448, %v441, %v445
      %v450 = vand.u32 2147483647, %v425
      %vm451 = vcmp.eq.f32.partialorder %v450, 8.507059e+37
      %v452 = vand.u32 %v425, 2147483648
      %v453 = vor.u32 1.1754944e-38, %v452
      %v454 = vsel %vm451, %v453, %v449
      %v455 = vmul.f32 1.0, %v454
      %v458 = vperm.slane %v440, 0
      %v459 = vperm.slane %v440, 1
      %v460 = vperm.slane %v440, 2
      %v461 = vperm.slane %v440, 3
      %v462 = vperm.slane %v440, 4
      %v463 = vperm.slane %v440, 5
      %v464 = vperm.slane %v440, 6
      %v465 = vperm.slane %v440, 7
      %v466 = vperm.slane %v455, 0
      %v467 = vperm.slane %v455, 1
      %v468 = vperm.slane %v455, 2
      %v469 = vperm.slane %v455, 3
      %v482 = vmul.f32 %v171, %v458
      %v483 = vmul.f32 %v172, %v459
      %v484 = vmul.f32 %v173, %v460
      %v485 = vmul.f32 %v174, %v461
      %v486 = vmul.f32 %v175, %v462
      %v487 = vmul.f32 %v176, %v463
      %v488 = vmul.f32 %v177, %v464
      %v489 = vmul.f32 %v178, %v465
      %v490 = vmul.f32 %v179, %v466
      %v491 = vmul.f32 %v180, %v467
      %v492 = vmul.f32 %v181, %v468
      %v493 = vmul.f32 %v182, %v469
      %494 = vst [vmem:[%s170] sm:$0x3] %v482
      %495 = vst [vmem:[%s170 + $0x2] sm:$0x3] %v483
      %496 = vst [vmem:[%s170 + $0x4] sm:$0x3] %v484
      %497 = vst [vmem:[%s170 + $0x6] sm:$0x3] %v485
      %498 = vst [vmem:[%s170 + $0x8] sm:$0x3] %v486
      %499 = vst [vmem:[%s170 + $0xa] sm:$0x3] %v487
      %500 = vst [vmem:[%s170 + $0xc] sm:$0x3] %v488
      %501 = vst [vmem:[%s170 + $0xe] sm:$0x3] %v489
      %502 = vst [vmem:[%s170 + $0x10] sm:$0x3] %v490
      %503 = vst [vmem:[%s170 + $0x12] sm:$0x3] %v491
      %504 = vst [vmem:[%s170 + $0x14] sm:$0x3] %v492
      %505 = vst [vmem:[%s170 + $0x16] sm:$0x3] %v493
      %p506 = scmp.lt.s32.totalorder %s14, 1
      %s507 = scalar_select %p506, %s14, 1
      %s508 = smul.addr %s507, 12
      %s509 = smul.addr %s508, 2
      %s510 = scalar_lea.vmem %s3, %s509
      // Predicated region
      $region33: #{_lambda_.1} parent=31 // pred_check
        %p511 = pneg %p100
      $region34: #{_lambda_.1} parent=31 // pred_check_branch
        %513 = sbr.rel (%p511) target = $region36
      $region35: #{_lambda_.1} parent=31 // pred_region
        _
      $region36: #{_lambda_.1} parent=31 // pred_fallthru
        _
    $region32: #{_lambda_.1} parent=5 // pred_fallthru
      _
    %p514 = scmp.le.s32.totalorder 2, %s9
    // Predicated region
    $region37: #{_lambda_.1} parent=5 // pred_check
      %p515 = pneg %p514
    $region38: #{_lambda_.1} parent=5 // pred_check_branch
      %517 = sbr.rel (%p515) target = $region40
    $region39: #{_lambda_.1} parent=5 // pred_region
      %s518 = ssub.s32 %s9, 2
      // Predicated region
      $region41: #{_lambda_.1} parent=39 // pred_check
        %p519 = pneg %p106
      $region42: #{_lambda_.1} parent=39 // pred_check_branch
        %521 = sbr.rel (%p519) target = $region44
      $region43: #{_lambda_.1} parent=39 // pred_region
        %p522 = scmp.lt.s32.totalorder %s15, 1
        %s523 = scalar_select %p522, %s15, 1
        %s524 = smul.addr %s523, 12
        %s525 = smul.addr %s524, 2
        %s526 = scalar_lea.vmem %s3, %s525
      $region44: #{_lambda_.1} parent=39 // pred_fallthru
        _
    $region40: #{_lambda_.1} parent=5 // pred_fallthru
      _
  $region6: #{_lambda_.1} parent=0 // loop_footer
    %s13 = sadd.s32 1, %s9
  $region7: #{_lambda_.1} parent=0 // loop_footer_branch
    %8 = sbr.rel target = $region3
  $region8: #{_lambda_.1} parent=0 // loop_exit
    _

</llo_original>
